<compile_context>
chip_gen: v6e
topology: v6e:2x2x1
jax: 0.10.0
libtpu: 0.0.40
codegen_flags: <defaults>
</compile_context>

<pallas_src>
import functools
import math

import jax
import jax.numpy as jnp
from jax.experimental import pallas as pl
from jax.experimental.pallas import tpu as pltpu

_EPS = 1e-5


def _round_up(a, b):
    return (a + b - 1) // b * b


def _gbn_kernel(x_ref, gamma_ref, beta_ref, o_ref, *, n_rows, chunk_size, k_per_block):
    """One block = (K, chunk_size, TD): K ghost batches x one feature tile."""
    x = x_ref[...].astype(jnp.float32)                              # (K, C, TD)

    # Valid-row count of each ghost batch in this block. Handles the ragged
    # final torch.chunk chunk: padded rows are zero (excluded via the count)
    # and their outputs are sliced away in the wrapper.
    first_chunk = pl.program_id(0) * k_per_block
    chunk_ids = first_chunk + jax.lax.broadcasted_iota(
        jnp.int32, (k_per_block, 1, 1), 0)
    n_valid = jnp.clip(n_rows - chunk_ids * chunk_size, 1, chunk_size)
    inv_n = 1.0 / n_valid.astype(jnp.float32)                       # (K, 1, 1)

    # Single-pass statistics over the batch (sublane) axis; padded rows are 0.
    sum_x = jnp.sum(x, axis=1, keepdims=True)                       # (K, 1, TD)
    sum_xx = jnp.sum(x * x, axis=1, keepdims=True)                  # (K, 1, TD)
    mean = sum_x * inv_n
    var = jnp.maximum(sum_xx * inv_n - mean * mean, 0.0)            # biased var
    inv_std = jax.lax.rsqrt(var + _EPS)

    # Fold the affine into a single per-element multiply-add.
    gamma = gamma_ref[...].astype(jnp.float32)                      # (1, 1, TD)
    beta = beta_ref[...].astype(jnp.float32)                        # (1, 1, TD)
    scale = inv_std * gamma                                         # (K, 1, TD)
    shift = beta - mean * scale                                     # (K, 1, TD)
    o_ref[...] = (x * scale + shift).astype(o_ref.dtype)


def ghost_batch_norm_1d(x, gamma, beta, virtual_batch_size=512,
                        *, feature_tile=1024, block_bytes=2 * 1024 * 1024):
    """GhostBatchNorm1d forward. x: [N, D], gamma/beta: [D]."""
    n, d = x.shape
    if n == 0:
        # Empty batch: BatchNorm1d on an empty tensor is a value no-op.
        return x

    # torch.chunk semantics: chunk size = ceil(N / ceil(N / vbs)); last chunk
    # may be smaller (ragged) and is normalized with its own statistics.
    num_chunks_req = math.ceil(n / virtual_batch_size)
    chunk_size = math.ceil(n / num_chunks_req)
    total_chunks = math.ceil(n / chunk_size)

    # Lane-dense feature tiling: pad D up to a multiple of the 128-aligned tile.
    td = min(feature_tile, _round_up(d, 128))
    d_pad = _round_up(d, td)

    # Amortize per-grid-step overhead: K ghost batches per block, targeting a
    # ~2 MiB block so double-buffered in+out stays well under 16 MiB of VMEM
    # (safe on v5e/v6e/v7x with the explicit 32 MiB limit below).
    itemsize = jnp.dtype(x.dtype).itemsize
    k_max = max(1, block_bytes // (chunk_size * td * itemsize))
    k = min(k_max, total_chunks)
    while total_chunks % k:
        k -= 1

    n_pad = total_chunks * chunk_size
    x_p = jnp.pad(x, ((0, n_pad - n), (0, d_pad - d)))
    x_p = x_p.reshape(total_chunks, chunk_size, d_pad)
    gamma_p = jnp.pad(gamma.reshape(1, 1, d),
                      ((0, 0), (0, 0), (0, d_pad - d)), constant_values=1)
    beta_p = jnp.pad(beta.reshape(1, 1, d), ((0, 0), (0, 0), (0, d_pad - d)))

    grid = (total_chunks // k, d_pad // td)
    kernel = functools.partial(_gbn_kernel, n_rows=n, chunk_size=chunk_size,
                               k_per_block=k)

    cost = pl.CostEstimate(
        flops=6 * n_pad * d_pad,
        transcendentals=total_chunks * d_pad,
        bytes_accessed=2 * n_pad * d_pad * itemsize + 2 * d_pad * itemsize,
    )

    out = pl.pallas_call(
        kernel,
        out_shape=jax.ShapeDtypeStruct((total_chunks, chunk_size, d_pad), x.dtype),
        grid_spec=pltpu.PrefetchScalarGridSpec(
            num_scalar_prefetch=0,
            grid=grid,
            in_specs=[
                pl.BlockSpec((k, chunk_size, td), lambda i, j: (i, 0, j)),  # x
                pl.BlockSpec((1, 1, td), lambda i, j: (0, 0, j)),           # gamma
                pl.BlockSpec((1, 1, td), lambda i, j: (0, 0, j)),           # beta
            ],
            out_specs=pl.BlockSpec((k, chunk_size, td), lambda i, j: (i, 0, j)),
        ),
        compiler_params=pltpu.CompilerParams(
            dimension_semantics=("parallel", "parallel"),
            vmem_limit_bytes=32 * 1024 * 1024,
        ),
        cost_estimate=cost,
    )(x_p, gamma_p, beta_p)

    return out.reshape(n_pad, d_pad)[:n, :d]


def _reference(x, gamma, beta, virtual_batch_size):
    """Pure-JAX reference (training-mode BN per torch.chunk chunk)."""
    n, _ = x.shape
    num_chunks_req = math.ceil(n / virtual_batch_size)
    chunk_size = math.ceil(n / num_chunks_req)
    outs = []
    for s in range(0, n, chunk_size):
        xc = x[s:s + chunk_size].astype(jnp.float32)
        mean = jnp.mean(xc, axis=0, keepdims=True)
        var = jnp.mean((xc - mean) ** 2, axis=0, keepdims=True)
        outs.append((xc - mean) / jnp.sqrt(var + _EPS) * gamma + beta)
    return jnp.concatenate(outs, axis=0).astype(x.dtype)


if __name__ == "__main__":
    key = jax.random.PRNGKey(0)
    N, D, VBS = 16, 32, 8          # batch, input_dim, virtual_batch_size
    kx, kg, kb = jax.random.split(key, 3)

    x = jax.random.normal(kx, (N, D), dtype=jnp.float32)
    # BatchNorm1d after reset_parameters(): weight=1, bias=0.
    gamma = jnp.ones((D,), dtype=jnp.float32)
    beta = jnp.zeros((D,), dtype=jnp.float32)

    out = jax.block_until_ready(
        ghost_batch_norm_1d(x, gamma, beta, virtual_batch_size=VBS))
    ref = _reference(x, gamma, beta, VBS)
    assert out.shape == (N, D)
    assert jnp.allclose(out, ref, atol=1e-4, rtol=1e-5), "mismatch vs reference"

    # Ragged batch (torch.chunk's uneven final chunk) + non-trivial affine.
    N2, VBS2 = 13, 8
    x2 = jax.random.normal(kg, (N2, D), dtype=jnp.float32)
    gamma2 = 1.0 + 0.1 * jax.random.normal(kb, (D,), dtype=jnp.float32)
    beta2 = 0.05 * jnp.arange(D, dtype=jnp.float32)
    out2 = jax.block_until_ready(
        ghost_batch_norm_1d(x2, gamma2, beta2, virtual_batch_size=VBS2))
    ref2 = _reference(x2, gamma2, beta2, VBS2)
    assert out2.shape == (N2, D)
    assert jnp.allclose(out2, ref2, atol=1e-4, rtol=1e-5), "ragged mismatch"

    print("KERNEL_OK")
</pallas_src>

<mosaic_0001>
module attributes {stable_mosaic.version = 11 : i64} {
  func.func @_gbn_kernel(%arg0: i32, %arg1: i32, %arg2: memref<2x8x128xf32, #tpu.memory_space<vmem>>, %arg3: memref<1x1x128xf32, #tpu.memory_space<vmem>>, %arg4: memref<1x1x128xf32, #tpu.memory_space<vmem>>, %arg5: memref<2x8x128xf32, #tpu.memory_space<vmem>>) attributes {dimension_semantics = [#tpu.dimension_semantics<parallel>, #tpu.dimension_semantics<parallel>], iteration_bounds = array<i64: 1, 1>, scalar_prefetch = 0 : i64, scratch_operands = 0 : i64, tpu.core_type = #tpu.core_type<tc>, window_params = [{transform_indices = @transform_0, window_bounds = array<i64: 2, 8, 128>}, {transform_indices = @transform_1, window_bounds = array<i64: 1, 1, 128>}, {transform_indices = @transform_2, window_bounds = array<i64: 1, 1, 128>}, {transform_indices = @transform_3, window_bounds = array<i64: 2, 8, 128>}]} {
    %c0 = arith.constant 0 : index
    %c0_0 = arith.constant 0 : index
    %c0_1 = arith.constant 0 : index
    %0 = vector.load %arg2[%c0, %c0_0, %c0_1] : memref<2x8x128xf32, #tpu.memory_space<vmem>>, vector<2x8x128xf32>
    %c2_i32 = arith.constant 2 : i32
    %1 = arith.muli %arg0, %c2_i32 : i32
    %2 = tpu.iota {dimensions = array<i32: 0>} : vector<2x1x1xi32>
    %3 = vector.broadcast %1 : i32 to vector<2x1x1xi32>
    %4 = arith.addi %3, %2 : vector<2x1x1xi32>
    %c8_i32 = arith.constant 8 : i32
    %5 = vector.broadcast %c8_i32 : i32 to vector<2x1x1xi32>
    %6 = arith.muli %4, %5 : vector<2x1x1xi32>
    %c16_i32 = arith.constant 16 : i32
    %7 = vector.broadcast %c16_i32 : i32 to vector<2x1x1xi32>
    %8 = arith.subi %7, %6 : vector<2x1x1xi32>
    %c1_i32 = arith.constant 1 : i32
    %c8_i32_2 = arith.constant 8 : i32
    %9 = vector.broadcast %c1_i32 : i32 to vector<2x1x1xi32>
    %10 = arith.maxsi %9, %8 : vector<2x1x1xi32>
    %11 = vector.broadcast %c8_i32_2 : i32 to vector<2x1x1xi32>
    %12 = arith.minsi %11, %10 : vector<2x1x1xi32>
    %13 = arith.sitofp %12 : vector<2x1x1xi32> to vector<2x1x1xf32>
    %cst = arith.constant 1.000000e+00 : f32
    %14 = vector.broadcast %cst : f32 to vector<2x1x1xf32>
    %15 = arith.divf %14, %13 : vector<2x1x1xf32>
    %cst_3 = arith.constant dense<0.000000e+00> : vector<2x128xf32>
    %16 = vector.multi_reduction <add>, %0, %cst_3 [1] : vector<2x8x128xf32> to vector<2x128xf32>
    %17 = vector.shape_cast %16 : vector<2x128xf32> to vector<2x1x128xf32>
    %18 = arith.mulf %0, %0 : vector<2x8x128xf32>
    %cst_4 = arith.constant dense<0.000000e+00> : vector<2x128xf32>
    %19 = vector.multi_reduction <add>, %18, %cst_4 [1] : vector<2x8x128xf32> to vector<2x128xf32>
    %20 = vector.shape_cast %19 : vector<2x128xf32> to vector<2x1x128xf32>
    %21 = vector.broadcast %15 : vector<2x1x1xf32> to vector<2x1x128xf32>
    %22 = arith.mulf %17, %21 : vector<2x1x128xf32>
    %23 = vector.broadcast %15 : vector<2x1x1xf32> to vector<2x1x128xf32>
    %24 = arith.mulf %20, %23 : vector<2x1x128xf32>
    %25 = arith.mulf %22, %22 : vector<2x1x128xf32>
    %26 = arith.subf %24, %25 : vector<2x1x128xf32>
    %cst_5 = arith.constant 0.000000e+00 : f32
    %27 = vector.broadcast %cst_5 : f32 to vector<2x1x128xf32>
    %28 = arith.maximumf %26, %27 : vector<2x1x128xf32>
    %cst_6 = arith.constant 9.99999974E-6 : f32
    %29 = vector.broadcast %cst_6 : f32 to vector<2x1x128xf32>
    %30 = arith.addf %28, %29 : vector<2x1x128xf32>
    %31 = math.rsqrt %30 : vector<2x1x128xf32>
    %c0_7 = arith.constant 0 : index
    %c0_8 = arith.constant 0 : index
    %c0_9 = arith.constant 0 : index
    %32 = vector.load %arg3[%c0_7, %c0_8, %c0_9] : memref<1x1x128xf32, #tpu.memory_space<vmem>>, vector<1x1x128xf32>
    %c0_10 = arith.constant 0 : index
    %c0_11 = arith.constant 0 : index
    %c0_12 = arith.constant 0 : index
    %33 = vector.load %arg4[%c0_10, %c0_11, %c0_12] : memref<1x1x128xf32, #tpu.memory_space<vmem>>, vector<1x1x128xf32>
    %34 = vector.broadcast %32 : vector<1x1x128xf32> to vector<2x1x128xf32>
    %35 = arith.mulf %31, %34 : vector<2x1x128xf32>
    %36 = arith.mulf %22, %35 : vector<2x1x128xf32>
    %37 = vector.broadcast %33 : vector<1x1x128xf32> to vector<2x1x128xf32>
    %38 = arith.subf %37, %36 : vector<2x1x128xf32>
    %39 = vector.broadcast %35 : vector<2x1x128xf32> to vector<2x8x128xf32>
    %40 = arith.mulf %0, %39 : vector<2x8x128xf32>
    %41 = vector.broadcast %38 : vector<2x1x128xf32> to vector<2x8x128xf32>
    %42 = arith.addf %40, %41 : vector<2x8x128xf32>
    %c0_13 = arith.constant 0 : index
    %c0_14 = arith.constant 0 : index
    %c0_15 = arith.constant 0 : index
    %43 = vector.load %arg5[%c0_13, %c0_14, %c0_15] : memref<2x8x128xf32, #tpu.memory_space<vmem>>, vector<2x8x128xf32>
    tpu.vector_store %arg5[%c0_13, %c0_14, %c0_15], %42 {strides = array<i32>} : memref<2x8x128xf32, #tpu.memory_space<vmem>>, vector<2x8x128xf32>,
    return
  }
  func.func @transform_0(%arg0: i32, %arg1: i32) -> (i32, i32, i32) {
    %c0_i32 = arith.constant 0 : i32
    %c0_i32_0 = arith.constant 0 : i32
    return %arg0, %c0_i32, %arg1 : i32, i32, i32
  }
  func.func @transform_1(%arg0: i32, %arg1: i32) -> (i32, i32, i32) {
    %c0_i32 = arith.constant 0 : i32
    %c0_i32_0 = arith.constant 0 : i32
    %c0_i32_1 = arith.constant 0 : i32
    return %c0_i32, %c0_i32_0, %arg1 : i32, i32, i32
  }
  func.func @transform_2(%arg0: i32, %arg1: i32) -> (i32, i32, i32) {
    %c0_i32 = arith.constant 0 : i32
    %c0_i32_0 = arith.constant 0 : i32
    %c0_i32_1 = arith.constant 0 : i32
    return %c0_i32, %c0_i32_0, %arg1 : i32, i32, i32
  }
  func.func @transform_3(%arg0: i32, %arg1: i32) -> (i32, i32, i32) {
    %c0_i32 = arith.constant 0 : i32
    %c0_i32_0 = arith.constant 0 : i32
    return %arg0, %c0_i32, %arg1 : i32, i32, i32
  }
}

</mosaic_0001>

<llo_original>
// kernel: tpu_custom_call.1
$region0: #{tpu_custom_call.1}
  #allocation0 [shape = 'u32[]', space=smem, size = 0x4, offset = 0x4, fixed_abs, tag = 'smem constant byte address 0x4 - core index']
  #allocation1 [shape = 'u32[144,128]{1,0:T(1,128)}', space=vmem, size = 0x12000, scoped, tag = 'internal scratch']
  %s0 = inlined_call_operand.hbm [shape: f32[2,8,128], index: 0, kind: input, shape index: {}]
  %s1 = inlined_call_operand.vmem [shape: f32[1,1,128], index: 1, kind: input, shape index: {}]
  %s2 = inlined_call_operand.vmem [shape: f32[1,1,128], index: 2, kind: input, shape index: {}]
  %s3 = inlined_call_operand.hbm [shape: f32[2,8,128], index: 3, kind: output, shape index: {}]
  %s4 = sld [smem:[#allocation0]]
  $region26: #{tpu_custom_call.1} parent=0
    _
  %s6 = ssub.s32 1, %s4
  %s7 = scalar_select 0, %s6, %s4
  $region1: #{tpu_custom_call.1} parent=0
    #allocation2 [shape = 'u8[8192]{0}', space=vmem, size = 0x2000, scoped, tag = 'input window, operand 0, single buffered']
    #allocation3 [shape = 's32[1]{0}', space=sflag, size = 0x4, scoped, tag = 'scoped memory for tpu_custom_call.1']
    #allocation4 [shape = 's32[1]{0}', space=sflag, size = 0x4, scoped, tag = 'scoped memory for tpu_custom_call.1']
    #allocation5 [shape = 'u8[8192]{0}', space=vmem, size = 0x2000, scoped, tag = 'output window, operand 0, single buffered']
    %8 = vsyncpa [#allocation3], 0
    %9 = vsyncpa [#allocation4], 0
    // Predicated region
    $region2: #{tpu_custom_call.1} parent=1 // pred_check
      _
    $region3: #{tpu_custom_call.1} parent=1 // pred_check_branch
      %11 = sbr.rel (0) target = $region5
    $region4: #{tpu_custom_call.1} parent=1 // pred_region
      %s13 = ssub.s32 256, 256
      %14 = vsyncadd [#allocation3], %s13
      %s15 = sshll.u32 [#allocation2], 4
      %s16 = int_to_ptr.vmem [resolvable:$true] %s15
      %21 = dma.hbm_to_vmem [thread:$0]  %s0, 256, %s16, [#allocation3], 128, 128, 8
    $region5: #{tpu_custom_call.1} parent=1 // pred_fallthru
      _
    // Predicated region
    $region6: #{tpu_custom_call.1} parent=1 // pred_check
      _
    $region7: #{tpu_custom_call.1} parent=1 // pred_check_branch
      %23 = sbr.rel (0) target = $region9
    $region8: #{tpu_custom_call.1} parent=1 // pred_region
      _
    $region9: #{tpu_custom_call.1} parent=1 // pred_fallthru
      _
    // Predicated region
    $region10: #{tpu_custom_call.1} parent=1 // pred_check
      _
    $region11: #{tpu_custom_call.1} parent=1 // pred_check_branch
      %25 = sbr.rel (0) target = $region13
    $region12: #{tpu_custom_call.1} parent=1 // pred_region
      _
    $region13: #{tpu_custom_call.1} parent=1 // pred_fallthru
      _
    // Predicated region
    $region14: #{tpu_custom_call.1} parent=1 // pred_check
      _
    $region15: #{tpu_custom_call.1} parent=1 // pred_check_branch
      %27 = sbr.rel (0) target = $region17
    $region16: #{tpu_custom_call.1} parent=1 // pred_region
      %28 = dma.done [#allocation3], 256
    $region17: #{tpu_custom_call.1} parent=1 // pred_fallthru
      _
    %v29 = vld [vmem:[#allocation2] sm:$0xff]
    %v30 = vld [vmem:[#allocation2 + $0x8] sm:$0xff]
    %s31 = smul.u32 0, 2
    %v32 = vstv %s31
    %v33 = vadd.s32 %v32, 1
    %v34 = vmul.u32 %v32, 8
    %v35 = vmul.u32 %v33, 8
    %v36 = vsub.s32 16, %v34
    %v37 = vsub.s32 16, %v35
    %vm38 = vcmp.gt.s32.totalorder %v36, 1
    %v39 = vsel %vm38, %v36, 1
    %vm40 = vcmp.gt.s32.totalorder %v37, 1
    %v41 = vsel %vm40, %v37, 1
    %vm42 = vcmp.lt.s32.totalorder %v39, 8
    %v43 = vsel %vm42, %v39, 8
    %vm44 = vcmp.lt.s32.totalorder %v41, 8
    %v45 = vsel %vm44, %v41, 8
    %v46 = vcvt.s32.f32 %v43
    %v47 = vcvt.s32.f32 %v45
    %v48 = vrcp.pop %v46
    %v49 = vmul.f32 1.0, %v48
    %v50 = vrcp.pop %v47
    %v51 = vmul.f32 1.0, %v50
    %v52 = vrot.slane %v29, 4
    %v53 = vadd.f32 %v29, %v52
    %v54 = vrot.slane %v53, 2
    %v55 = vadd.f32 %v53, %v54
    %v56 = vrot.slane %v55, 1
    %v57 = vadd.f32 %v55, %v56
    %v58 = vrot.slane %v30, 4
    %v59 = vadd.f32 %v30, %v58
    %v60 = vrot.slane %v59, 2
    %v61 = vadd.f32 %v59, %v60
    %v62 = vrot.slane %v61, 1
    %v63 = vadd.f32 %v61, %v62
    %v64 = vmul.f32 %v29, %v29
    %v65 = vmul.f32 %v30, %v30
    %v66 = vrot.slane %v64, 4
    %v67 = vadd.f32 %v64, %v66
    %v68 = vrot.slane %v67, 2
    %v69 = vadd.f32 %v67, %v68
    %v70 = vrot.slane %v69, 1
    %v71 = vadd.f32 %v69, %v70
    %v72 = vrot.slane %v65, 4
    %v73 = vadd.f32 %v65, %v72
    %v74 = vrot.slane %v73, 2
    %v75 = vadd.f32 %v73, %v74
    %v76 = vrot.slane %v75, 1
    %v77 = vadd.f32 %v75, %v76
    %v78 = vmul.f32 %v57, %v49
    %v79 = vmul.f32 %v63, %v51
    %v80 = vmul.f32 %v71, %v49
    %v81 = vmul.f32 %v77, %v51
    %v82 = vmul.f32 %v78, %v78
    %v83 = vmul.f32 %v79, %v79
    %v84 = vsub.f32 %v80, %v82
    %v85 = vsub.f32 %v81, %v83
    %v86 = vmax.f32 %v84, 0.0
    %v87 = vmax.f32 %v85, 0.0
    %v88 = vadd.f32 %v86, 1e-05
    %v89 = vadd.f32 %v87, 1e-05
    %v90 = vrsqrt.pop %v88
    %v91 = vrsqrt.pop %v89
    %v92 = vld [vmem:[%s1] sm:$0x1]
    %v93 = vld [vmem:[%s2] sm:$0x1]
    %v94 = vmul.f32 %v90, %v92
    %v95 = vmul.f32 %v91, %v92
    %v96 = vmul.f32 %v78, %v94
    %v97 = vmul.f32 %v79, %v95
    %v98 = vsub.f32 %v93, %v96
    %v99 = vsub.f32 %v93, %v97
    %v100 = vlaneseq
    %v101 = vshrl.u32 %v100, 7
    %v102 = vsub.s32 0, %v101
    %v103 = vrot.slane %v94, %v102
    %v104 = vlaneseq
    %v105 = vshrl.u32 %v104, 7
    %v106 = vsub.s32 0, %v105
    %v107 = vrot.slane %v95, %v106
    %v108 = vmul.f32 %v29, %v103
    %v109 = vmul.f32 %v30, %v107
    %v112 = vlaneseq
    %v113 = vshrl.u32 %v112, 7
    %v114 = vsub.s32 0, %v113
    %v115 = vrot.slane %v98, %v114
    %v116 = vlaneseq
    %v117 = vshrl.u32 %v116, 7
    %v118 = vsub.s32 0, %v117
    %v119 = vrot.slane %v99, %v118
    %v122 = vadd.f32 %v108, %v115
    %v123 = vadd.f32 %v109, %v119
    %124 = vst [vmem:[#allocation5] sm:$0xff] %v122
    %125 = vst [vmem:[#allocation5 + $0x8] sm:$0xff] %v123
    // Predicated region
    $region18: #{tpu_custom_call.1} parent=1 // pred_check
      _
    $region19: #{tpu_custom_call.1} parent=1 // pred_check_branch
      %127 = sbr.rel (0) target = $region21
    $region20: #{tpu_custom_call.1} parent=1 // pred_region
      %s129 = ssub.s32 256, 256
      %130 = vsyncadd [#allocation4], %s129
      %s131 = sshll.u32 [#allocation5], 4
      %s132 = int_to_ptr.vmem [resolvable:$true] %s131
      %137 = dma.vmem_to_hbm [thread:$0]  %s132, 256, %s3, [#allocation4], 128, 128, 8
    $region21: #{tpu_custom_call.1} parent=1 // pred_fallthru
      _
    // Predicated region
    $region22: #{tpu_custom_call.1} parent=1 // pred_check
      _
    $region23: #{tpu_custom_call.1} parent=1 // pred_check_branch
      %139 = sbr.rel (0) target = $region25
    $region24: #{tpu_custom_call.1} parent=1 // pred_region
      %140 = dma.done [#allocation4], 256
    $region25: #{tpu_custom_call.1} parent=1 // pred_fallthru
      _
    %141 = vsyncpa [#allocation3], 1
    %142 = vsyncpa [#allocation4], 1

</llo_original>
